<compile_context>
chip_gen: v7x
topology: tpu7x:2x2x1
jax: 0.10.0
libtpu: 0.0.40
codegen_flags: <defaults>
</compile_context>

<pallas_src>
import math

import jax
import jax.numpy as jnp
from jax import lax
from jax.experimental import pallas as pl
from jax.experimental.pallas import tpu as pltpu

_LANE = 128
_SUBLANE = 8


# ----------------------------- VMEM budgeting --------------------------------

def _vmem_limit_bytes():
    """Generation-aware scoped-VMEM request: ~3/4 of physical VMEM, capped.
    v5e/v6e (128 MiB) -> 96 MiB, v7x (64 MiB) -> 48 MiB; conservative fallback."""
    try:
        cap = int(pltpu.get_tpu_info().vmem_capacity_bytes)
    except Exception:
        cap = 64 * 1024 * 1024
    return max(16 * 1024 * 1024, min((cap * 3) // 4, 96 * 1024 * 1024))


def _round_down(v, m):
    return max(m, (v // m) * m)


def _pick_sublane_tile(full, target):
    """Second-to-last-dim tile: full dim if small, else a multiple of 8."""
    if full <= target:
        return full
    return _round_down(target, _SUBLANE)


def _pick_lane_tile(full, target):
    """Last-dim tile: full dim if small, else a 256-multiple (v6e/v7x MXU
    width), falling back to a 128-multiple.  It need NOT divide the dim: ragged
    K tails are masked in-kernel, ragged output columns are clipped by Pallas."""
    if full <= max(target, _LANE):
        return full
    if target >= 256:
        return _round_down(target, 256)
    return _round_down(target, _LANE)


def _shrink_lane(t):
    if t > 256:
        return _round_down(t // 2, _LANE)
    if t > _LANE:
        return _LANE
    return t


def _shrink_sublane(t):
    if t > _SUBLANE:
        return _round_down(t // 2, _SUBLANE)
    return t


def _shared_tile_plan(M, N, K, in_itemsize, out_itemsize, use_acc, budget):
    # bf16-ish inputs: raise the row tile so weight-streaming arithmetic
    # intensity keeps v6e compute-bound.
    tm = _pick_sublane_tile(M, 1024 if in_itemsize <= 2 else 512)
    tn = _pick_lane_tile(N, 512)
    tk = _pick_lane_tile(K, 1024)

    def need(tm_, tn_, tk_):
        b = 2 * (tm_ * tk_ + tn_ * tk_ + tn_) * in_itemsize   # x, w, bias (double-buffered)
        b += 2 * tm_ * tn_ * out_itemsize                      # output block
        if use_acc:
            b += tm_ * tn_ * 4                                  # f32 accumulator scratch
        return b

    for _ in range(64):
        if need(tm, tn, tk) <= budget:
            break
        t = _shrink_lane(tk)
        if t != tk:
            tk = t
            continue
        t = _shrink_lane(tn)
        if t != tn:
            tn = t
            continue
        t = _shrink_sublane(tm)
        if t != tm:
            tm = t
            continue
        break
    return tm, tn, tk


def _parallel_tile_plan(M, P, out, K, in_itemsize, out_itemsize, budget):
    # Head tile: full P when small (per-head matmuls are statically unrolled),
    # otherwise a multiple of 8 so the (tp, ...) block dims stay layout-legal.
    tp = P if P <= 16 else 8
    tk = _pick_lane_tile(K, 1024)
    tm = _pick_sublane_tile(M, 512)

    def need(tm_, tp_, tk_):
        b = 2 * tm_ * tp_ * tk_ * in_itemsize        # x block
        b += 2 * tp_ * out * tk_ * in_itemsize       # weight block (now budgeted)
        b += 2 * tp_ * out * in_itemsize             # bias block
        b += 2 * tm_ * tp_ * out * out_itemsize      # output block
        b += tm_ * tp_ * out * 4                     # f32 accumulator scratch
        return b

    for _ in range(64):
        if need(tm, tp, tk) <= budget:
            break
        t = _shrink_lane(tk)
        if t != tk:
            tk = t
            continue
        t = _shrink_sublane(tm)
        if t != tm:
            tm = t
            continue
        t = _shrink_sublane(tp)
        if t != tp:
            tp = t
            continue
        break
    # TODO(synk): very large out_features would additionally need an out-tiling
    # grid axis here (mirroring the shared path's N axis).
    return tm, tp, tk


# --------------------------------- kernels -----------------------------------

def _make_shared_kernel(K, tk, use_acc):
    """x_ref: (tm, tk)  w_ref: (tn, tk)  b_ref: (1, tn)  o_ref: (tm, tn).
    NT matmul (contract the shared `in` axis), f32 accumulation over the K grid
    axis; the ragged K tail of the edge block is zero-masked before the dot so
    out-of-bounds garbage never reaches the accumulator."""
    ragged = (K % tk) != 0

    def kernel(x_ref, w_ref, b_ref, o_ref, *acc):
        k = pl.program_id(2)
        nk = pl.num_programs(2)

        x = x_ref[...]
        w = w_ref[...]
        if ragged:
            keep = lax.broadcasted_iota(jnp.int32, (1, tk), 1) < (K - k * tk)
            x = jnp.where(keep, x, jnp.zeros_like(x))
            w = jnp.where(keep, w, jnp.zeros_like(w))

        part = lax.dot_general(
            x, w,
            dimension_numbers=(((1,), (1,)), ((), ())),
            preferred_element_type=jnp.float32)

        if use_acc:
            # Low-precision output dtype: keep a dedicated f32 scratch.
            acc_ref = acc[0]

            @pl.when(k == 0)
            def _():
                acc_ref[...] = jnp.zeros_like(acc_ref)

            acc_ref[...] += part

            @pl.when(k == nk - 1)
            def _():
                o_ref[...] = (acc_ref[...]
                              + b_ref[...].astype(jnp.float32)).astype(o_ref.dtype)
        else:
            # f32 output: accumulate directly into the resident output block
            # (saves tm*tn*4 bytes of VMEM and a final copy).
            @pl.when(k == 0)
            def _():
                o_ref[...] = part

            @pl.when(k > 0)
            def _():
                o_ref[...] = o_ref[...] + part

            @pl.when(k == nk - 1)
            def _():
                o_ref[...] = o_ref[...] + b_ref[...].astype(o_ref.dtype)

    return kernel


def _make_parallel_kernel(K, tk, tp):
    """x_ref: (tm, tp, tk)  w_ref: (tp, out, tk)  b_ref: (tp, out)
    o_ref: (tm, tp, out)   acc_ref: (tm, tp, out) f32.
    One NT matmul per head, Ref-sliced (no full 3-D value materialization);
    heads are a static unroll (tp <= 16).  Output block is written once at the
    last K step.
    TODO(synk): when out_features << MXU width (128/256) the per-head matmul
    under-uses MXU columns; a (P, in, M)-transposed formulation would fix that
    at the cost of wrapper transposes."""
    ragged = (K % tk) != 0

    def kernel(x_ref, w_ref, b_ref, o_ref, acc_ref):
        k = pl.program_id(2)
        nk = pl.num_programs(2)

        @pl.when(k == 0)
        def _():
            acc_ref[...] = jnp.zeros_like(acc_ref)

        keep = None
        if ragged:
            keep = lax.broadcasted_iota(jnp.int32, (1, tk), 1) < (K - k * tk)

        for p in range(tp):                    # static unroll, tp <= 16
            xp = x_ref[:, p, :]                # (tm, tk) ref load
            wp = w_ref[p]                      # (out, tk) ref load
            if ragged:
                xp = jnp.where(keep, xp, jnp.zeros_like(xp))
                wp = jnp.where(keep, wp, jnp.zeros_like(wp))
            acc_ref[:, p, :] += lax.dot_general(
                xp, wp,
                dimension_numbers=(((1,), (1,)), ((), ())),
                preferred_element_type=jnp.float32)

        @pl.when(k == nk - 1)
        def _():
            bias = b_ref[...].astype(jnp.float32)
            o_ref[...] = (acc_ref[...] + bias[None, :, :]).astype(o_ref.dtype)

    return kernel


# --------------------------------- wrapper ------------------------------------

def parallel_linear(x, weight, bias, *, already_parallel=None):
    """Pallas equivalent of ParallelLinear.forward.

    x:      (..., in_features)  or  (..., n_parallel, in_features)
    weight: (n_parallel, out_features, in_features)
    bias:   (n_parallel, out_features)
    returns (..., n_parallel, out_features)

    Like the PyTorch module, default path selection sniffs shapes
    (already-parallel iff x.shape[-2] == n_parallel).  Pass `already_parallel`
    explicitly when that is ambiguous (e.g. n_datapoints == n_parallel).
    """
    n_parallel, out_features, in_features = weight.shape
    if x.shape[-1] != in_features:
        raise ValueError(f"x last dim {x.shape[-1]} != in_features {in_features}")

    if already_parallel is None:
        already_parallel = (x.ndim >= 2 and x.shape[-2] == n_parallel)

    out_dtype = x.dtype
    in_itemsize = jnp.dtype(x.dtype).itemsize
    out_itemsize = jnp.dtype(out_dtype).itemsize
    use_acc = out_dtype != jnp.float32

    vmem_limit = _vmem_limit_bytes()
    budget = (vmem_limit * 3) // 5            # headroom for Mosaic-internal scratch

    if not already_parallel:
        # ---------------- shared-input path: one fused matmul -----------------
        batch_dims = x.shape[:-1]
        M = math.prod(batch_dims) if batch_dims else 1
        K = in_features
        N = n_parallel * out_features

        x2 = x.reshape(M, K)
        w2 = weight.reshape(N, K)             # merge leading dims only: no transpose
        b2 = bias.reshape(1, N)

        tm, tn, tk = _shared_tile_plan(M, N, K, in_itemsize, out_itemsize,
                                       use_acc, budget)
        grid = (pl.cdiv(M, tm), pl.cdiv(N, tn), pl.cdiv(K, tk))

        out = pl.pallas_call(
            _make_shared_kernel(K, tk, use_acc),
            out_shape=jax.ShapeDtypeStruct((M, N), out_dtype),
            grid_spec=pltpu.PrefetchScalarGridSpec(
                num_scalar_prefetch=0,
                grid=grid,
                in_specs=[
                    pl.BlockSpec((tm, tk), lambda i, j, k: (i, k)),
                    pl.BlockSpec((tn, tk), lambda i, j, k: (j, k)),
                    pl.BlockSpec((1, tn), lambda i, j, k: (0, j)),
                ],
                out_specs=pl.BlockSpec((tm, tn), lambda i, j, k: (i, j)),
                scratch_shapes=([pltpu.VMEM((tm, tn), jnp.float32)]
                                if use_acc else []),
            ),
            compiler_params=pltpu.CompilerParams(
                dimension_semantics=("parallel", "parallel", "arbitrary"),
                vmem_limit_bytes=vmem_limit),
        )(x2, w2, b2)

        # (M, P*out) is already the final memory order -> free reshape.
        return out.reshape(*batch_dims, n_parallel, out_features)

    else:
        # ------------- already-parallel path: per-head weights ----------------
        batch_dims = x.shape[:-2]
        M = math.prod(batch_dims) if batch_dims else 1
        K = in_features
        P = n_parallel
        x3 = x.reshape(M, P, K)

        tm, tp, tk = _parallel_tile_plan(M, P, out_features, K,
                                         in_itemsize, out_itemsize, budget)
        # Grid: P outermost, M inner, K last (reduction).  With a single K tile
        # the weight block index (p, 0, 0) is constant across the inner M sweep,
        # so each head's weights are fetched from HBM exactly once.
        grid = (pl.cdiv(P, tp), pl.cdiv(M, tm), pl.cdiv(K, tk))

        out = pl.pallas_call(
            _make_parallel_kernel(K, tk, tp),
            out_shape=jax.ShapeDtypeStruct((M, P, out_features), out_dtype),
            grid_spec=pltpu.PrefetchScalarGridSpec(
                num_scalar_prefetch=0,
                grid=grid,
                in_specs=[
                    pl.BlockSpec((tm, tp, tk), lambda p, i, k: (i, p, k)),
                    pl.BlockSpec((tp, out_features, tk), lambda p, i, k: (p, 0, k)),
                    pl.BlockSpec((tp, out_features), lambda p, i, k: (p, 0)),
                ],
                out_specs=pl.BlockSpec((tm, tp, out_features),
                                       lambda p, i, k: (i, p, 0)),
                scratch_shapes=[pltpu.VMEM((tm, tp, out_features), jnp.float32)],
            ),
            compiler_params=pltpu.CompilerParams(
                dimension_semantics=("parallel", "parallel", "arbitrary"),
                vmem_limit_bytes=vmem_limit),
        )(x3, weight, bias)

        # (M, P, out) is already the final memory order -> free reshape.
        return out.reshape(*batch_dims, P, out_features)


def init_parallel_linear(key, in_features, out_features, n_parallel, dtype=jnp.float32):
    """Matches PyTorch reset_parameters(): kaiming_uniform_(a=sqrt(5)) ->
    U(-1/sqrt(fan_in), 1/sqrt(fan_in)) for weight; bias same bound; fan_in = in_features."""
    kw, kb = jax.random.split(key)
    bound = 1.0 / math.sqrt(in_features)
    weight = jax.random.uniform(
        kw, (n_parallel, out_features, in_features), dtype, minval=-bound, maxval=bound)
    bias = jax.random.uniform(
        kb, (n_parallel, out_features), dtype, minval=-bound, maxval=bound)
    return weight, bias


if __name__ == "__main__":
    key = jax.random.PRNGKey(0)
    k_p1, k_x1, k_x2, k_p2, k_x3, k_x4 = jax.random.split(key, 6)

    # Tolerances account for the MXU possibly running f32 matmuls as bf16 passes
    # at default precision; real indexing/masking bugs produce O(1) errors.
    TOL = dict(atol=3e-2, rtol=3e-2)

    # ------------------------ small single-tile case -------------------------
    batch, n_datapoints = 2, 8
    in_features, out_features, n_parallel = 32, 16, 4
    weight, bias = init_parallel_linear(k_p1, in_features, out_features, n_parallel)

    x1 = jax.random.normal(k_x1, (batch, n_datapoints, in_features), jnp.float32)
    o1 = jax.block_until_ready(parallel_linear(x1, weight, bias))
    r1 = jnp.einsum('bdi,koi->bdko', x1, weight, precision='highest') + bias[None, None]
    assert o1.shape == (batch, n_datapoints, n_parallel, out_features)
    assert jnp.allclose(o1, r1, **TOL), float(jnp.max(jnp.abs(o1 - r1)))

    x2 = jax.random.normal(k_x2, (batch, n_datapoints, n_parallel, in_features), jnp.float32)
    o2 = jax.block_until_ready(parallel_linear(x2, weight, bias))
    r2 = jnp.einsum('bdki,koi->bdko', x2, weight, precision='highest') + bias[None, None]
    assert o2.shape == (batch, n_datapoints, n_parallel, out_features)
    assert jnp.allclose(o2, r2, **TOL), float(jnp.max(jnp.abs(o2 - r2)))

    # --------- multi-tile / ragged case: exercises masked K tail, ------------
    # --------- ragged M rows, ragged head tiles and K accumulation -----------
    batch2, n_dp2 = 2, 300                   # M = 600 -> ragged vs. 512-row tile
    in2, out2, np2 = 1100, 16, 20            # K = 1100 -> ragged vs. tk; P = 20 > 16
    weight2, bias2 = init_parallel_linear(k_p2, in2, out2, np2)

    x3 = jax.random.normal(k_x3, (batch2, n_dp2, in2), jnp.float32)
    o3 = jax.block_until_ready(parallel_linear(x3, weight2, bias2))
    r3 = jnp.einsum('bdi,koi->bdko', x3, weight2, precision='highest') + bias2[None, None]
    assert o3.shape == (batch2, n_dp2, np2, out2)
    assert jnp.allclose(o3, r3, **TOL), float(jnp.max(jnp.abs(o3 - r3)))

    x4 = jax.random.normal(k_x4, (batch2, n_dp2, np2, in2), jnp.float32)
    o4 = jax.block_until_ready(parallel_linear(x4, weight2, bias2))
    r4 = jnp.einsum('bdki,koi->bdko', x4, weight2, precision='highest') + bias2[None, None]
    assert o4.shape == (batch2, n_dp2, np2, out2)
    assert jnp.allclose(o4, r4, **TOL), float(jnp.max(jnp.abs(o4 - r4)))

    print("KERNEL_OK")
</pallas_src>

<mosaic_0001>
module attributes {stable_mosaic.version = 11 : i64} {
  func.func @kernel(%arg0: i32, %arg1: i32, %arg2: i32, %arg3: memref<16x32xf32, #tpu.memory_space<vmem>>, %arg4: memref<64x32xf32, #tpu.memory_space<vmem>>, %arg5: memref<1x64xf32, #tpu.memory_space<vmem>>, %arg6: memref<16x64xf32, #tpu.memory_space<vmem>>) attributes {dimension_semantics = [#tpu.dimension_semantics<parallel>, #tpu.dimension_semantics<parallel>, #tpu.dimension_semantics<arbitrary>], iteration_bounds = array<i64: 1, 1, 1>, scalar_prefetch = 0 : i64, scratch_operands = 0 : i64, tpu.core_type = #tpu.core_type<tc>, window_params = [{transform_indices = @transform_0, window_bounds = array<i64: 16, 32>}, {transform_indices = @transform_1, window_bounds = array<i64: 64, 32>}, {transform_indices = @transform_2, window_bounds = array<i64: 1, 64>}, {transform_indices = @transform_3, window_bounds = array<i64: 16, 64>}]} {
    %c0 = arith.constant 0 : index
    %c0_0 = arith.constant 0 : index
    %0 = vector.load %arg3[%c0, %c0_0] : memref<16x32xf32, #tpu.memory_space<vmem>>, vector<16x32xf32>
    %c0_1 = arith.constant 0 : index
    %c0_2 = arith.constant 0 : index
    %1 = vector.load %arg4[%c0_1, %c0_2] : memref<64x32xf32, #tpu.memory_space<vmem>>, vector<64x32xf32>
    %cst = arith.constant dense<0.000000e+00> : vector<16x64xf32>
    %2 = tpu.matmul %0, %1, %cst {dimension_numbers = #tpu.dot_dimension_numbers<[1], [1], [0], [0], [0, 0, 1, 0], [], []>} : vector<16x32xf32>, vector<64x32xf32>, vector<16x64xf32> -> vector<16x64xf32>
    %c0_i32 = arith.constant 0 : i32
    %3 = arith.cmpi eq, %arg2, %c0_i32 : i32
    %4 = arith.extui %3 : i1 to i32
    %c0_i32_3 = arith.constant 0 : i32
    %5 = arith.cmpi ne, %4, %c0_i32_3 : i32
    scf.if %5 {
      %c0_8 = arith.constant 0 : index
      %c0_9 = arith.constant 0 : index
      %12 = vector.load %arg6[%c0_8, %c0_9] : memref<16x64xf32, #tpu.memory_space<vmem>>, vector<16x64xf32>
      tpu.vector_store %arg6[%c0_8, %c0_9], %2 {strides = array<i32>} : memref<16x64xf32, #tpu.memory_space<vmem>>, vector<16x64xf32>,
    } else {
    }
    %c0_i32_4 = arith.constant 0 : i32
    %6 = arith.cmpi sgt, %arg2, %c0_i32_4 : i32
    %7 = arith.extui %6 : i1 to i32
    %c0_i32_5 = arith.constant 0 : i32
    %8 = arith.cmpi ne, %7, %c0_i32_5 : i32
    scf.if %8 {
      %c0_8 = arith.constant 0 : index
      %c0_9 = arith.constant 0 : index
      %12 = vector.load %arg6[%c0_8, %c0_9] : memref<16x64xf32, #tpu.memory_space<vmem>>, vector<16x64xf32>
      %13 = arith.addf %12, %2 : vector<16x64xf32>
      %c0_10 = arith.constant 0 : index
      %c0_11 = arith.constant 0 : index
      %14 = vector.load %arg6[%c0_10, %c0_11] : memref<16x64xf32, #tpu.memory_space<vmem>>, vector<16x64xf32>
      tpu.vector_store %arg6[%c0_10, %c0_11], %13 {strides = array<i32>} : memref<16x64xf32, #tpu.memory_space<vmem>>, vector<16x64xf32>,
    } else {
    }
    %c0_i32_6 = arith.constant 0 : i32
    %9 = arith.cmpi eq, %arg2, %c0_i32_6 : i32
    %10 = arith.extui %9 : i1 to i32
    %c0_i32_7 = arith.constant 0 : i32
    %11 = arith.cmpi ne, %10, %c0_i32_7 : i32
    scf.if %11 {
      %c0_8 = arith.constant 0 : index
      %c0_9 = arith.constant 0 : index
      %12 = vector.load %arg6[%c0_8, %c0_9] : memref<16x64xf32, #tpu.memory_space<vmem>>, vector<16x64xf32>
      %c0_10 = arith.constant 0 : index
      %c0_11 = arith.constant 0 : index
      %13 = vector.load %arg5[%c0_10, %c0_11] : memref<1x64xf32, #tpu.memory_space<vmem>>, vector<1x64xf32>
      %14 = vector.broadcast %13 : vector<1x64xf32> to vector<16x64xf32>
      %15 = arith.addf %12, %14 : vector<16x64xf32>
      %c0_12 = arith.constant 0 : index
      %c0_13 = arith.constant 0 : index
      %16 = vector.load %arg6[%c0_12, %c0_13] : memref<16x64xf32, #tpu.memory_space<vmem>>, vector<16x64xf32>
      tpu.vector_store %arg6[%c0_12, %c0_13], %15 {strides = array<i32>} : memref<16x64xf32, #tpu.memory_space<vmem>>, vector<16x64xf32>,
    } else {
    }
    return
  }
  func.func @transform_0(%arg0: i32, %arg1: i32, %arg2: i32) -> (i32, i32) {
    %c0_i32 = arith.constant 0 : i32
    return %arg0, %arg2 : i32, i32
  }
  func.func @transform_1(%arg0: i32, %arg1: i32, %arg2: i32) -> (i32, i32) {
    %c0_i32 = arith.constant 0 : i32
    return %arg1, %arg2 : i32, i32
  }
  func.func @transform_2(%arg0: i32, %arg1: i32, %arg2: i32) -> (i32, i32) {
    %c0_i32 = arith.constant 0 : i32
    %c0_i32_0 = arith.constant 0 : i32
    return %c0_i32, %arg1 : i32, i32
  }
  func.func @transform_3(%arg0: i32, %arg1: i32, %arg2: i32) -> (i32, i32) {
    %c0_i32 = arith.constant 0 : i32
    return %arg0, %arg1 : i32, i32
  }
}

</mosaic_0001>

<llo_original>
// kernel: tpu_custom_call.1
$region0: #{tpu_custom_call.1}
  #allocation0 [shape = 'u32[]', space=smem, size = 0x4, offset = 0x4, fixed_abs, tag = 'smem constant byte address 0x4 - core index']
  #allocation1 [shape = 'u32[144,128]{1,0:T(1,128)}', space=vmem, size = 0x12000, scoped, tag = 'internal scratch']
  %s0 = inlined_call_operand.vmem [shape: f32[16,32], index: 0, kind: input, shape index: {}]
  %s1 = inlined_call_operand.vmem [shape: f32[64,32], index: 1, kind: input, shape index: {}]
  %s2 = inlined_call_operand.vmem [shape: f32[1,64], index: 2, kind: input, shape index: {}]
  %s3 = inlined_call_operand.hbm [shape: f32[16,64], index: 3, kind: output, shape index: {}]
  %s4 = sld [smem:[#allocation0]]
  $region34: #{tpu_custom_call.1} parent=0
    _
  %s6 = ssub.s32 1, %s4
  %s7 = scalar_select 0, %s6, %s4
  $region1: #{tpu_custom_call.1} parent=0
    #allocation2 [shape = 'u8[8192]{0}', space=vmem, size = 0x2000, scoped, tag = 'output window, operand 0, single buffered']
    #allocation3 [shape = 's32[1]{0}', space=sflag, size = 0x4, scoped, tag = 'scoped memory for tpu_custom_call.1']
    %8 = vsyncpa [#allocation3], 0
    // Predicated region
    $region2: #{tpu_custom_call.1} parent=1 // pred_check
      _
    $region3: #{tpu_custom_call.1} parent=1 // pred_check_branch
      %10 = sbr.rel (0) target = $region5
    $region4: #{tpu_custom_call.1} parent=1 // pred_region
      _
    $region5: #{tpu_custom_call.1} parent=1 // pred_fallthru
      _
    // Predicated region
    $region6: #{tpu_custom_call.1} parent=1 // pred_check
      _
    $region7: #{tpu_custom_call.1} parent=1 // pred_check_branch
      %12 = sbr.rel (0) target = $region9
    $region8: #{tpu_custom_call.1} parent=1 // pred_region
      _
    $region9: #{tpu_custom_call.1} parent=1 // pred_fallthru
      _
    // Predicated region
    $region10: #{tpu_custom_call.1} parent=1 // pred_check
      _
    $region11: #{tpu_custom_call.1} parent=1 // pred_check_branch
      %14 = sbr.rel (0) target = $region13
    $region12: #{tpu_custom_call.1} parent=1 // pred_region
      _
    $region13: #{tpu_custom_call.1} parent=1 // pred_fallthru
      _
    %v15 = vld [vmem:[%s0] sm:$0xff]
    %v16 = vld [vmem:[%s0 + $0x8] sm:$0xff]
    %v17 = vld [vmem:[%s1] sm:$0xff]
    %v18 = vld [vmem:[%s1 + $0x8] sm:$0xff]
    %v19 = vld [vmem:[%s1 + $0x10] sm:$0xff]
    %v20 = vld [vmem:[%s1 + $0x18] sm:$0xff]
    %v21 = vld [vmem:[%s1 + $0x20] sm:$0xff]
    %v22 = vld [vmem:[%s1 + $0x28] sm:$0xff]
    %v23 = vld [vmem:[%s1 + $0x30] sm:$0xff]
    %v24 = vld [vmem:[%s1 + $0x38] sm:$0xff]
    %vm25 = vcmask 261120
    %v27 = vsel %vm25, %v15, 0
    %v30 = vsel %vm25, %v16, 0
    %v33 = vsel %vm25, %v17, 0
    %v36 = vsel %vm25, %v18, 0
    %v39 = vsel %vm25, %v19, 0
    %v42 = vsel %vm25, %v20, 0
    %v45 = vsel %vm25, %v21, 0
    %v48 = vsel %vm25, %v22, 0
    %v51 = vsel %vm25, %v23, 0
    %v54 = vsel %vm25, %v24, 0
    %56 = vmatprep.subr.mxu0 0.0
    %57 = vmatpush1.xpose.msra.mxu0 %v33
    %58 = vmatprep.subr.mxu0 0.0
    %59 = vmatpush1.xpose.msra.mxu0 %v36
    %60 = vmatprep.subr.mxu0 0.0
    %61 = vmatpush1.xpose.msra.mxu0 %v39
    %62 = vmatprep.subr.mxu0 0.0
    %63 = vmatpush1.xpose.msra.mxu0 %v42
    %64 = vmatprep.subr.mxu0 0.0
    %65 = vmatpush1.xpose.msra.mxu0 %v45
    %66 = vmatprep.subr.mxu0 0.0
    %67 = vmatpush1.xpose.msra.mxu0 %v48
    %68 = vmatprep.subr.mxu0 0.0
    %69 = vmatpush1.xpose.msra.mxu0 %v51
    %70 = vmatprep.subr.mxu0 0.0
    %71 = vmatpush1.xpose.msra.mxu0 %v54
    %72 = vmatprep.subr.mxu0 0.0
    %73 = vmatpush1.xpose.msra.mxu0 0.0
    %74 = vmatprep.subr.mxu0 0.0
    %75 = vmatpush1.xpose.msra.mxu0 0.0
    %76 = vmatprep.subr.mxu0 0.0
    %77 = vmatpush1.xpose.msra.mxu0 0.0
    %78 = vmatprep.subr.mxu0 0.0
    %79 = vmatpush1.xpose.msra.mxu0 0.0
    %80 = vmatprep.subr.mxu0 0.0
    %81 = vmatpush1.xpose.msra.mxu0 0.0
    %82 = vmatprep.subr.mxu0 0.0
    %83 = vmatpush1.xpose.msra.mxu0 0.0
    %84 = vmatprep.subr.mxu0 0.0
    %85 = vmatpush1.xpose.msra.mxu0 0.0
    %86 = vmatprep.subr.mxu0 0.0
    %87 = vmatpush1.xpose.msra.mxu0 0.0
    %88 = vmatprep.subr.mxu0 0.0
    %89 = vmatpush1.xpose.msra.mxu0 0.0
    %90 = vmatprep.subr.mxu0 0.0
    %91 = vmatpush1.xpose.msra.mxu0 0.0
    %92 = vmatprep.subr.mxu0 0.0
    %93 = vmatpush1.xpose.msra.mxu0 0.0
    %94 = vmatprep.subr.mxu0 0.0
    %95 = vmatpush1.xpose.msra.mxu0 0.0
    %96 = vmatprep.subr.mxu0 0.0
    %97 = vmatpush1.xpose.msra.mxu0 0.0
    %98 = vmatprep.subr.mxu0 0.0
    %99 = vmatpush1.xpose.msra.mxu0 0.0
    %100 = vmatprep.subr.mxu0 0.0
    %101 = vmatpush1.xpose.msra.mxu0 0.0
    %102 = vmatprep.subr.mxu0 0.0
    %103 = vmatpush1.xpose.msra.mxu0 0.0
    %104 = vmatprep.subr.mxu0 0.0
    %105 = vmatpush1.xpose.msra.mxu0 0.0
    %106 = vmatprep.subr.mxu0 0.0
    %107 = vmatpush1.xpose.msra.mxu0 0.0
    %108 = vmatprep.subr.mxu0 0.0
    %109 = vmatpush1.xpose.msra.mxu0 0.0
    %110 = vmatprep.subr.mxu0 0.0
    %111 = vmatpush1.xpose.msra.mxu0 0.0
    %112 = vmatprep.subr.mxu0 0.0
    %113 = vmatpush1.xpose.msra.mxu0 0.0
    %114 = vmatprep.subr.mxu0 0.0
    %115 = vmatpush1.xpose.msra.mxu0 0.0
    %116 = vmatprep.subr.mxu0 0.0
    %117 = vmatpush1.xpose.msra.mxu0 0.0
    %118 = vmatprep.subr.mxu0 0.0
    %119 = vmatpush1.xpose.msra.mxu0 0.0
    %120 = vmatprep.mubr.f32.mxu0 0.0
    %121 = vmatmul.mubr.f32.gmra.mrb[0].mxu0 %v27
    %v122 = vpop.f32.mrb[0].mxu0
    %v123 = vadd.f32 0.0, %v122
    %v124 = vpop.f32.mrb[0].mxu0
    %125 = vmatprep.mubr.f32.mxu0 0.0
    %126 = vmatmul.mubr.f32.gmra.mrb[0].mxu0 %v30
    %v127 = vpop.f32.mrb[0].mxu0
    %v128 = vadd.f32 0.0, %v127
    %v129 = vpop.f32.mrb[0].mxu0
    %130 = vdwg.mxu0
    %p131 = scmp.eq.s32.totalorder 0, 0
    // Predicated region
    $region14: #{tpu_custom_call.1} parent=1 // pred_check
      %p132 = pneg %p131
    $region15: #{tpu_custom_call.1} parent=1 // pred_check_branch
      %134 = sbr.rel (%p132) target = $region17
    $region16: #{tpu_custom_call.1} parent=1 // pred_region
      %vm135 = vcmask 523264
      %136 = vst.msk [vmem:[#allocation2] sm:$0xff] %vm135, %v123
      %137 = vst.msk [vmem:[#allocation2 + $0x8] sm:$0xff] %vm135, %v128
    $region17: #{tpu_custom_call.1} parent=1 // pred_fallthru
      _
    %p138 = scmp.gt.s32.totalorder 0, 0
    // Predicated region
    $region18: #{tpu_custom_call.1} parent=1 // pred_check
      %p139 = pneg %p138
    $region19: #{tpu_custom_call.1} parent=1 // pred_check_branch
      %141 = sbr.rel (%p139) target = $region21
    $region20: #{tpu_custom_call.1} parent=1 // pred_region
      %v142 = vld [vmem:[#allocation2] sm:$0xff]
      %v143 = vld [vmem:[#allocation2 + $0x8] sm:$0xff]
      %v144 = vadd.f32 %v142, %v123
      %v145 = vadd.f32 %v143, %v128
      %vm146 = vcmask 523264
      %147 = vst.msk [vmem:[#allocation2] sm:$0xff] %vm146, %v144
      %148 = vst.msk [vmem:[#allocation2 + $0x8] sm:$0xff] %vm146, %v145
    $region21: #{tpu_custom_call.1} parent=1 // pred_fallthru
      _
    // Predicated region
    $region22: #{tpu_custom_call.1} parent=1 // pred_check
      %p149 = pneg %p131
    $region23: #{tpu_custom_call.1} parent=1 // pred_check_branch
      %151 = sbr.rel (%p149) target = $region25
    $region24: #{tpu_custom_call.1} parent=1 // pred_region
      %v152 = vld [vmem:[#allocation2] sm:$0xff]
      %v153 = vld [vmem:[#allocation2 + $0x8] sm:$0xff]
      %v154 = vld [vmem:[%s2] sm:$0x1]
      %v156 = vlaneseq
      %v157 = vshrl.u32 %v156, 7
      %v158 = vsub.s32 0, %v157
      %v159 = vrot.slane %v154, %v158
      %v161 = vadd.f32 %v152, %v159
      %v162 = vadd.f32 %v153, %v159
      %vm163 = vcmask 523264
      %164 = vst.msk [vmem:[#allocation2] sm:$0xff] %vm163, %v161
      %165 = vst.msk [vmem:[#allocation2 + $0x8] sm:$0xff] %vm163, %v162
    $region25: #{tpu_custom_call.1} parent=1 // pred_fallthru
      _
    // Predicated region
    $region26: #{tpu_custom_call.1} parent=1 // pred_check
      _
    $region27: #{tpu_custom_call.1} parent=1 // pred_check_branch
      %167 = sbr.rel (0) target = $region29
    $region28: #{tpu_custom_call.1} parent=1 // pred_region
      %s169 = ssub.s32 256, 256
      %170 = vsyncadd [#allocation3], %s169
      %s171 = sshll.u32 [#allocation2], 4
      %s172 = int_to_ptr.vmem [resolvable:$true] %s171
      %177 = dma.vmem_to_hbm [thread:$0]  %s172, 256, %s3, [#allocation3], 128, 128, 8
    $region29: #{tpu_custom_call.1} parent=1 // pred_fallthru
      _
    // Predicated region
    $region30: #{tpu_custom_call.1} parent=1 // pred_check
      _
    $region31: #{tpu_custom_call.1} parent=1 // pred_check_branch
      %179 = sbr.rel (0) target = $region33
    $region32: #{tpu_custom_call.1} parent=1 // pred_region
      %180 = dma.done [#allocation3], 256
    $region33: #{tpu_custom_call.1} parent=1 // pred_fallthru
      _
    %181 = vsyncpa [#allocation3], 1

</llo_original>
